<compile_context>
chip_gen: v7x
topology: tpu7x:2x2x1
jax: 0.10.0
libtpu: 0.0.40
codegen_flags: <defaults>
</compile_context>

<pallas_src>
import jax
import jax.numpy as jnp
from jax import lax
from jax.experimental import pallas as pl
from jax.experimental.pallas import tpu as pltpu

# ----- synthetic config (small shapes) -----
VOCAB = 96          # config.vocab_size
HIDDEN = 32         # config.hidden_size
MAX_POS = 64        # config.max_position_embeddings
TYPE_VOCAB = 2      # config.type_vocab_size
PAD_IDX = 1         # config.pad_token_id
IMG_HIDDEN = 48     # config.image_hidden_size
LN_EPS = 1e-5       # config.layer_norm_eps
B, S = 2, 16        # batch, sequence length
PAST_KV_LEN = 0
IMG_POS = 1         # sequence slot that receives the image embedding

OFF_POS = VOCAB                      # row offset of the position table in the stacked table
OFF_TT = VOCAB + MAX_POS             # row offset of the token-type table
TBL = VOCAB + MAX_POS + TYPE_VOCAB   # 162 real rows
TBL_PAD = 256                        # padded so the stacked table is (8,128)-friendly


def roberta_image_embeddings_kernel(
    ids_ref,      # (S, 1)          int32 token ids (column)
    amask_ref,    # (1, S)          int32 attention mask (row)
    tt_ref,       # (S, 1)          int32 token type ids (column)
    img_ref,      # (1, IMG_HIDDEN) f32   image embedding
    table_ref,    # (TBL_PAD, H)    f32   stacked [word|pos|type] embedding table
    w_img_ref,    # (IMG_HIDDEN, H) f32
    b_img_ref,    # (1, H)          f32
    gamma_ref,    # (1, H)          f32
    beta_ref,     # (1, H)          f32
    out_ref,      # (S, H)          f32
):
    f32 = jnp.float32
    Sk = ids_ref.shape[0]
    H = table_ref.shape[1]

    # ---- position ids on the VPU/XLU (overlaps with the MXU matmuls below) ----
    # create_position_ids_from_input_ids(attention_mask, PAD_IDX):
    #   mask = (attention_mask != PAD_IDX); pos = (cumsum(mask) + past) * mask + PAD_IDX
    nonpad_row = (amask_ref[...] != PAD_IDX).astype(f32)                  # (1, S)
    i_sub = lax.broadcasted_iota(jnp.int32, (Sk, Sk), 0)                  # target position i
    j_lane = lax.broadcasted_iota(jnp.int32, (Sk, Sk), 1)                 # source position j
    # inclusive cumsum as a masked lane reduction: csum[i] = sum_{j<=i} mask[j]
    csum_col = jnp.sum(jnp.where(j_lane <= i_sub, nonpad_row, 0.0),
                       axis=1, keepdims=True)                             # (S, 1)
    # mask in column orientation via the same reduction (j == i picks the diagonal)
    nonpad_col = jnp.sum(jnp.where(j_lane == i_sub, nonpad_row, 0.0),
                         axis=1, keepdims=True)                           # (S, 1)
    pos_col = ((csum_col + float(PAST_KV_LEN)) * nonpad_col).astype(jnp.int32) + PAD_IDX

    # ---- fused word/pos/type gather: one one-hot, one MXU matmul ----
    lane_v = lax.broadcasted_iota(jnp.int32, (Sk, TBL_PAD), 1)            # stacked-table row
    row_s = lax.broadcasted_iota(jnp.int32, (Sk, TBL_PAD), 0)             # sequence slot
    hit_word = (lane_v == ids_ref[...]) & (row_s != IMG_POS)              # drop word @ image slot
    hit_pos = lane_v == (pos_col + OFF_POS)
    hit_tt = lane_v == (tt_ref[...] + OFF_TT)
    # word / pos / type lane ranges are disjoint, so OR == sum of the three one-hots.
    onehot = (hit_word | hit_pos | hit_tt).astype(f32)                    # (S, TBL_PAD)
    emb = jnp.dot(onehot, table_ref[...], preferred_element_type=f32)     # (S, H)

    # ---- img2txt projection, spliced (added) at the image slot ----
    img_proj = jnp.dot(img_ref[...], w_img_ref[...],
                       preferred_element_type=f32) + b_img_ref[...]       # (1, H)
    seq_col = lax.broadcasted_iota(jnp.int32, (Sk, 1), 0)
    emb = emb + jnp.where(seq_col == IMG_POS, img_proj, 0.0)              # (S, H)

    # ---- LayerNorm over hidden, single-pass statistics ----
    inv_h = 1.0 / float(H)
    s1 = jnp.sum(emb, axis=1, keepdims=True)
    s2 = jnp.sum(emb * emb, axis=1, keepdims=True)
    mu = s1 * inv_h
    var = s2 * inv_h - mu * mu
    inv = lax.rsqrt(var + LN_EPS)

    # TODO(synk): nn.Dropout is eval-mode identity here (hidden_dropout_prob ignored).
    out_ref[...] = ((emb - mu) * inv * gamma_ref[...] + beta_ref[...]).astype(out_ref.dtype)


def roberta_image_embeddings(input_ids, attention_mask, token_type_ids, image_embeds, params):
    # -- parameter layout plumbing (would be precomputed once in practice) --
    table = jnp.concatenate(
        [params["w_word"], params["w_pos"], params["w_type"],
         jnp.zeros((TBL_PAD - TBL, HIDDEN), jnp.float32)], axis=0)         # (TBL_PAD, H)

    # -- input layout plumbing: id columns / mask row, one block per batch element --
    ids_col = input_ids[:, :, None].astype(jnp.int32)                      # (B, S, 1)
    tt_col = token_type_ids[:, :, None].astype(jnp.int32)                  # (B, S, 1)
    amask_row = attention_mask[:, None, :].astype(jnp.int32)               # (B, 1, S)
    img = image_embeds[:, None, :]                                         # (B, 1, IMG_HIDDEN)

    def full(shape):
        nd = len(shape)
        return pl.BlockSpec(shape, lambda b: (0,) * nd)

    def per_b(shape):
        nd = len(shape)
        return pl.BlockSpec((None,) + shape, lambda b: (b,) + (0,) * nd)

    flops = 2 * B * (S * TBL_PAD * HIDDEN + IMG_HIDDEN * HIDDEN)
    bytes_accessed = 4 * (input_ids.size + attention_mask.size + token_type_ids.size
                          + image_embeds.size + table.size + params["w_img"].size
                          + 3 * HIDDEN + B * S * HIDDEN)

    return pl.pallas_call(
        roberta_image_embeddings_kernel,
        out_shape=jax.ShapeDtypeStruct((B, S, HIDDEN), jnp.float32),
        grid=(B,),
        in_specs=[
            per_b((S, 1)),                 # token ids (column)
            per_b((1, S)),                 # attention mask (row)
            per_b((S, 1)),                 # token type ids (column)
            per_b((1, IMG_HIDDEN)),        # image embedding
            full((TBL_PAD, HIDDEN)),       # stacked embedding table (VMEM-resident)
            full((IMG_HIDDEN, HIDDEN)),    # img2txt weight
            full((1, HIDDEN)),             # img2txt bias
            full((1, HIDDEN)),             # LayerNorm gamma
            full((1, HIDDEN)),             # LayerNorm beta
        ],
        out_specs=per_b((S, HIDDEN)),
        compiler_params=pltpu.CompilerParams(
            dimension_semantics=("parallel",),
            vmem_limit_bytes=32 * 1024 * 1024),
        cost_estimate=pl.CostEstimate(
            flops=flops, transcendentals=B * S, bytes_accessed=bytes_accessed),
    )(ids_col, amask_row, tt_col, img, table,
      params["w_img"], params["b_img"], params["gamma"], params["beta"])


def reference_forward(input_ids, attention_mask, token_type_ids, image_embeds, params):
    """Pure-JAX replica of the PyTorch forward for verification."""
    mask = (attention_mask != PAD_IDX).astype(jnp.int32)
    pos_ids = (jnp.cumsum(mask, axis=1) + PAST_KV_LEN) * mask + PAD_IDX
    txt = params["w_word"][input_ids]
    img_proj = image_embeds @ params["w_img"] + params["b_img"][0]
    merged = jnp.concatenate([txt[:, 0:1], img_proj[:, None, :], txt[:, 2:]], axis=1)
    emb = merged + params["w_type"][token_type_ids] + params["w_pos"][pos_ids]
    mu = emb.mean(-1, keepdims=True)
    var = ((emb - mu) ** 2).mean(-1, keepdims=True)
    return (emb - mu) / jnp.sqrt(var + LN_EPS) * params["gamma"][0] + params["beta"][0]


if __name__ == "__main__":
    key = jax.random.PRNGKey(0)
    k_ids, k_mask, k_img, k_w, k_p, k_t, k_i = jax.random.split(key, 7)

    input_ids = jax.random.randint(k_ids, (B, S), 0, VOCAB, dtype=jnp.int32)
    attention_mask = (jax.random.uniform(k_mask, (B, S)) > 0.25).astype(jnp.int32)
    token_type_ids = jnp.zeros((B, S), dtype=jnp.int32)
    image_embeds = jax.random.normal(k_img, (B, IMG_HIDDEN), dtype=jnp.float32)

    params = {
        "w_word": 0.02 * jax.random.normal(k_w, (VOCAB, HIDDEN), dtype=jnp.float32),
        "w_pos": 0.02 * jax.random.normal(k_p, (MAX_POS, HIDDEN), dtype=jnp.float32),
        "w_type": 0.02 * jax.random.normal(k_t, (TYPE_VOCAB, HIDDEN), dtype=jnp.float32),
        "w_img": 0.02 * jax.random.normal(k_i, (IMG_HIDDEN, HIDDEN), dtype=jnp.float32),
        "b_img": jnp.zeros((1, HIDDEN), dtype=jnp.float32) + 0.01,
        "gamma": jnp.ones((1, HIDDEN), dtype=jnp.float32),
        "beta": jnp.zeros((1, HIDDEN), dtype=jnp.float32),
    }

    out = roberta_image_embeddings(input_ids, attention_mask, token_type_ids,
                                   image_embeds, params)
    out = jax.block_until_ready(out)

    ref = reference_forward(input_ids, attention_mask, token_type_ids, image_embeds, params)
    assert out.shape == (B, S, HIDDEN)
    assert jnp.allclose(out, ref, atol=1e-4, rtol=1e-4), "mismatch vs reference"
    print("KERNEL_OK")
</pallas_src>

<mosaic_0001>
module attributes {stable_mosaic.version = 11 : i64} {
  func.func @roberta_image_embeddings_kernel(%arg0: i32, %arg1: memref<1x16x1xi32, #tpu.memory_space<vmem>>, %arg2: memref<1x1x16xi32, #tpu.memory_space<vmem>>, %arg3: memref<1x16x1xi32, #tpu.memory_space<vmem>>, %arg4: memref<1x1x48xf32, #tpu.memory_space<vmem>>, %arg5: memref<256x32xf32, #tpu.memory_space<vmem>>, %arg6: memref<48x32xf32, #tpu.memory_space<vmem>>, %arg7: memref<1x32xf32, #tpu.memory_space<vmem>>, %arg8: memref<1x32xf32, #tpu.memory_space<vmem>>, %arg9: memref<1x32xf32, #tpu.memory_space<vmem>>, %arg10: memref<1x16x32xf32, #tpu.memory_space<vmem>>) attributes {dimension_semantics = [#tpu.dimension_semantics<parallel>], iteration_bounds = array<i64: 2>, scalar_prefetch = 0 : i64, scratch_operands = 0 : i64, tpu.core_type = #tpu.core_type<tc>, window_params = [{transform_indices = @transform_0, window_bounds = array<i64: 1, 16, 1>}, {transform_indices = @transform_1, window_bounds = array<i64: 1, 1, 16>}, {transform_indices = @transform_2, window_bounds = array<i64: 1, 16, 1>}, {transform_indices = @transform_3, window_bounds = array<i64: 1, 1, 48>}, {pipeline_mode = #tpu.pipeline_mode<synchronous>, transform_indices = @transform_4, window_bounds = array<i64: 256, 32>}, {pipeline_mode = #tpu.pipeline_mode<synchronous>, transform_indices = @transform_5, window_bounds = array<i64: 48, 32>}, {pipeline_mode = #tpu.pipeline_mode<synchronous>, transform_indices = @transform_6, window_bounds = array<i64: 1, 32>}, {pipeline_mode = #tpu.pipeline_mode<synchronous>, transform_indices = @transform_7, window_bounds = array<i64: 1, 32>}, {pipeline_mode = #tpu.pipeline_mode<synchronous>, transform_indices = @transform_8, window_bounds = array<i64: 1, 32>}, {transform_indices = @transform_9, window_bounds = array<i64: 1, 16, 32>}]} {
    %c0 = arith.constant 0 : index
    %c0_0 = arith.constant 0 : index
    %c0_1 = arith.constant 0 : index
    %0 = vector.load %arg2[%c0, %c0_0, %c0_1] : memref<1x1x16xi32, #tpu.memory_space<vmem>>, vector<1x1x16xi32>
    %1 = vector.shape_cast %0 : vector<1x1x16xi32> to vector<1x16xi32>
    %c1_i32 = arith.constant 1 : i32
    %2 = vector.broadcast %c1_i32 : i32 to vector<1x16xi32>
    %3 = arith.cmpi ne, %1, %2 : vector<1x16xi32>
    %4 = arith.extui %3 : vector<1x16xi1> to vector<1x16xi32>
    %5 = arith.sitofp %4 : vector<1x16xi32> to vector<1x16xf32>
    %6 = tpu.iota {dimensions = array<i32: 0>} : vector<16x16xi32>
    %7 = tpu.iota {dimensions = array<i32: 1>} : vector<16x16xi32>
    %8 = arith.cmpi sle, %7, %6 : vector<16x16xi32>
    %cst = arith.constant 0.000000e+00 : f32
    %9 = vector.shape_cast %5 : vector<1x16xf32> to vector<1x16xf32>
    %10 = vector.broadcast %9 : vector<1x16xf32> to vector<16x16xf32>
    %11 = vector.broadcast %cst : f32 to vector<16x16xf32>
    %12 = arith.select %8, %10, %11 : vector<16x16xi1>, vector<16x16xf32>
    %cst_2 = arith.constant dense<0.000000e+00> : vector<16xf32>
    %13 = vector.multi_reduction <add>, %12, %cst_2 [1] : vector<16x16xf32> to vector<16xf32>
    %14 = vector.shape_cast %13 : vector<16xf32> to vector<16x1xf32>
    %15 = arith.cmpi eq, %7, %6 : vector<16x16xi32>
    %cst_3 = arith.constant 0.000000e+00 : f32
    %16 = vector.shape_cast %5 : vector<1x16xf32> to vector<1x16xf32>
    %17 = vector.broadcast %16 : vector<1x16xf32> to vector<16x16xf32>
    %18 = vector.broadcast %cst_3 : f32 to vector<16x16xf32>
    %19 = arith.select %15, %17, %18 : vector<16x16xi1>, vector<16x16xf32>
    %cst_4 = arith.constant dense<0.000000e+00> : vector<16xf32>
    %20 = vector.multi_reduction <add>, %19, %cst_4 [1] : vector<16x16xf32> to vector<16xf32>
    %21 = vector.shape_cast %20 : vector<16xf32> to vector<16x1xf32>
    %cst_5 = arith.constant 0.000000e+00 : f32
    %22 = vector.broadcast %cst_5 : f32 to vector<16x1xf32>
    %23 = arith.addf %14, %22 : vector<16x1xf32>
    %24 = arith.mulf %23, %21 : vector<16x1xf32>
    %25 = arith.fptosi %24 : vector<16x1xf32> to vector<16x1xi32>
    %c1_i32_6 = arith.constant 1 : i32
    %26 = vector.broadcast %c1_i32_6 : i32 to vector<16x1xi32>
    %27 = arith.addi %25, %26 : vector<16x1xi32>
    %28 = tpu.iota {dimensions = array<i32: 1>} : vector<16x256xi32>
    %29 = tpu.iota {dimensions = array<i32: 0>} : vector<16x256xi32>
    %c0_7 = arith.constant 0 : index
    %c0_8 = arith.constant 0 : index
    %c0_9 = arith.constant 0 : index
    %30 = vector.load %arg1[%c0_7, %c0_8, %c0_9] : memref<1x16x1xi32, #tpu.memory_space<vmem>>, vector<1x16x1xi32>
    %31 = vector.shape_cast %30 : vector<1x16x1xi32> to vector<16x1xi32>
    %32 = vector.broadcast %31 : vector<16x1xi32> to vector<16x256xi32>
    %33 = arith.cmpi eq, %28, %32 : vector<16x256xi32>
    %c1_i32_10 = arith.constant 1 : i32
    %34 = vector.broadcast %c1_i32_10 : i32 to vector<16x256xi32>
    %35 = arith.cmpi ne, %29, %34 : vector<16x256xi32>
    %36 = arith.andi %33, %35 : vector<16x256xi1>
    %c96_i32 = arith.constant 96 : i32
    %37 = vector.broadcast %c96_i32 : i32 to vector<16x1xi32>
    %38 = arith.addi %27, %37 : vector<16x1xi32>
    %39 = vector.broadcast %38 : vector<16x1xi32> to vector<16x256xi32>
    %40 = arith.cmpi eq, %28, %39 : vector<16x256xi32>
    %c0_11 = arith.constant 0 : index
    %c0_12 = arith.constant 0 : index
    %c0_13 = arith.constant 0 : index
    %41 = vector.load %arg3[%c0_11, %c0_12, %c0_13] : memref<1x16x1xi32, #tpu.memory_space<vmem>>, vector<1x16x1xi32>
    %42 = vector.shape_cast %41 : vector<1x16x1xi32> to vector<16x1xi32>
    %c160_i32 = arith.constant 160 : i32
    %43 = vector.broadcast %c160_i32 : i32 to vector<16x1xi32>
    %44 = arith.addi %42, %43 : vector<16x1xi32>
    %45 = vector.broadcast %44 : vector<16x1xi32> to vector<16x256xi32>
    %46 = arith.cmpi eq, %28, %45 : vector<16x256xi32>
    %47 = arith.ori %36, %40 : vector<16x256xi1>
    %48 = arith.ori %47, %46 : vector<16x256xi1>
    %49 = arith.extui %48 : vector<16x256xi1> to vector<16x256xi32>
    %50 = arith.sitofp %49 : vector<16x256xi32> to vector<16x256xf32>
    %c0_14 = arith.constant 0 : index
    %c0_15 = arith.constant 0 : index
    %51 = vector.load %arg5[%c0_14, %c0_15] : memref<256x32xf32, #tpu.memory_space<vmem>>, vector<256x32xf32>
    %cst_16 = arith.constant dense<0.000000e+00> : vector<16x32xf32>
    %52 = tpu.matmul %50, %51, %cst_16 {dimension_numbers = #tpu.dot_dimension_numbers<[1], [0], [0], [1], [0, 0, 1, 1], [], []>} : vector<16x256xf32>, vector<256x32xf32>, vector<16x32xf32> -> vector<16x32xf32>
    %c0_17 = arith.constant 0 : index
    %c0_18 = arith.constant 0 : index
    %c0_19 = arith.constant 0 : index
    %53 = vector.load %arg4[%c0_17, %c0_18, %c0_19] : memref<1x1x48xf32, #tpu.memory_space<vmem>>, vector<1x1x48xf32>
    %54 = vector.shape_cast %53 : vector<1x1x48xf32> to vector<1x48xf32>
    %c0_20 = arith.constant 0 : index
    %c0_21 = arith.constant 0 : index
    %55 = vector.load %arg6[%c0_20, %c0_21] : memref<48x32xf32, #tpu.memory_space<vmem>>, vector<48x32xf32>
    %cst_22 = arith.constant dense<0.000000e+00> : vector<1x32xf32>
    %56 = tpu.matmul %54, %55, %cst_22 {dimension_numbers = #tpu.dot_dimension_numbers<[1], [0], [0], [1], [0, 0, 1, 1], [], []>} : vector<1x48xf32>, vector<48x32xf32>, vector<1x32xf32> -> vector<1x32xf32>
    %c0_23 = arith.constant 0 : index
    %c0_24 = arith.constant 0 : index
    %57 = vector.load %arg7[%c0_23, %c0_24] : memref<1x32xf32, #tpu.memory_space<vmem>>, vector<1x32xf32>
    %58 = arith.addf %56, %57 : vector<1x32xf32>
    %59 = tpu.iota {dimensions = array<i32: 0>} : vector<16x1xi32>
    %c1_i32_25 = arith.constant 1 : i32
    %60 = vector.broadcast %c1_i32_25 : i32 to vector<16x1xi32>
    %61 = arith.cmpi eq, %59, %60 : vector<16x1xi32>
    %cst_26 = arith.constant 0.000000e+00 : f32
    %62 = vector.shape_cast %61 : vector<16x1xi1> to vector<16x1xi1>
    %63 = vector.broadcast %62 : vector<16x1xi1> to vector<16x32xi1>
    %64 = vector.shape_cast %58 : vector<1x32xf32> to vector<1x32xf32>
    %65 = vector.broadcast %64 : vector<1x32xf32> to vector<16x32xf32>
    %66 = vector.broadcast %cst_26 : f32 to vector<16x32xf32>
    %67 = arith.select %63, %65, %66 : vector<16x32xi1>, vector<16x32xf32>
    %68 = arith.addf %52, %67 : vector<16x32xf32>
    %cst_27 = arith.constant dense<0.000000e+00> : vector<16xf32>
    %69 = vector.multi_reduction <add>, %68, %cst_27 [1] : vector<16x32xf32> to vector<16xf32>
    %70 = vector.shape_cast %69 : vector<16xf32> to vector<16x1xf32>
    %71 = arith.mulf %68, %68 : vector<16x32xf32>
    %cst_28 = arith.constant dense<0.000000e+00> : vector<16xf32>
    %72 = vector.multi_reduction <add>, %71, %cst_28 [1] : vector<16x32xf32> to vector<16xf32>
    %73 = vector.shape_cast %72 : vector<16xf32> to vector<16x1xf32>
    %cst_29 = arith.constant 3.125000e-02 : f32
    %74 = vector.broadcast %cst_29 : f32 to vector<16x1xf32>
    %75 = arith.mulf %70, %74 : vector<16x1xf32>
    %cst_30 = arith.constant 3.125000e-02 : f32
    %76 = vector.broadcast %cst_30 : f32 to vector<16x1xf32>
    %77 = arith.mulf %73, %76 : vector<16x1xf32>
    %78 = arith.mulf %75, %75 : vector<16x1xf32>
    %79 = arith.subf %77, %78 : vector<16x1xf32>
    %cst_31 = arith.constant 9.99999974E-6 : f32
    %80 = vector.broadcast %cst_31 : f32 to vector<16x1xf32>
    %81 = arith.addf %79, %80 : vector<16x1xf32>
    %82 = math.rsqrt %81 : vector<16x1xf32>
    %83 = vector.broadcast %75 : vector<16x1xf32> to vector<16x32xf32>
    %84 = arith.subf %68, %83 : vector<16x32xf32>
    %85 = vector.broadcast %82 : vector<16x1xf32> to vector<16x32xf32>
    %86 = arith.mulf %84, %85 : vector<16x32xf32>
    %c0_32 = arith.constant 0 : index
    %c0_33 = arith.constant 0 : index
    %87 = vector.load %arg8[%c0_32, %c0_33] : memref<1x32xf32, #tpu.memory_space<vmem>>, vector<1x32xf32>
    %88 = vector.broadcast %87 : vector<1x32xf32> to vector<16x32xf32>
    %89 = arith.mulf %86, %88 : vector<16x32xf32>
    %c0_34 = arith.constant 0 : index
    %c0_35 = arith.constant 0 : index
    %90 = vector.load %arg9[%c0_34, %c0_35] : memref<1x32xf32, #tpu.memory_space<vmem>>, vector<1x32xf32>
    %91 = vector.broadcast %90 : vector<1x32xf32> to vector<16x32xf32>
    %92 = arith.addf %89, %91 : vector<16x32xf32>
    %c0_36 = arith.constant 0 : index
    %c0_37 = arith.constant 0 : index
    %c0_38 = arith.constant 0 : index
    %93 = vector.load %arg10[%c0_36, %c0_37, %c0_38] : memref<1x16x32xf32, #tpu.memory_space<vmem>>, vector<1x16x32xf32>
    %94 = vector.shape_cast %93 : vector<1x16x32xf32> to vector<16x32xf32>
    %95 = vector.shape_cast %92 : vector<16x32xf32> to vector<1x16x32xf32>
    tpu.vector_store %arg10[%c0_36, %c0_37, %c0_38], %95 {strides = array<i32>} : memref<1x16x32xf32, #tpu.memory_space<vmem>>, vector<1x16x32xf32>,
    return
  }
  func.func @transform_0(%arg0: i32) -> (i32, i32, i32) {
    %c0_i32 = arith.constant 0 : i32
    %c0_i32_0 = arith.constant 0 : i32
    %c0_i32_1 = arith.constant 0 : i32
    return %arg0, %c0_i32, %c0_i32_0 : i32, i32, i32
  }
  func.func @transform_1(%arg0: i32) -> (i32, i32, i32) {
    %c0_i32 = arith.constant 0 : i32
    %c0_i32_0 = arith.constant 0 : i32
    %c0_i32_1 = arith.constant 0 : i32
    return %arg0, %c0_i32, %c0_i32_0 : i32, i32, i32
  }
  func.func @transform_2(%arg0: i32) -> (i32, i32, i32) {
    %c0_i32 = arith.constant 0 : i32
    %c0_i32_0 = arith.constant 0 : i32
    %c0_i32_1 = arith.constant 0 : i32
    return %arg0, %c0_i32, %c0_i32_0 : i32, i32, i32
  }
  func.func @transform_3(%arg0: i32) -> (i32, i32, i32) {
    %c0_i32 = arith.constant 0 : i32
    %c0_i32_0 = arith.constant 0 : i32
    %c0_i32_1 = arith.constant 0 : i32
    return %arg0, %c0_i32, %c0_i32_0 : i32, i32, i32
  }
  func.func @transform_4(%arg0: i32) -> (i32, i32) {
    %c0_i32 = arith.constant 0 : i32
    %c0_i32_0 = arith.constant 0 : i32
    %c0_i32_1 = arith.constant 0 : i32
    return %c0_i32, %c0_i32_0 : i32, i32
  }
  func.func @transform_5(%arg0: i32) -> (i32, i32) {
    %c0_i32 = arith.constant 0 : i32
    %c0_i32_0 = arith.constant 0 : i32
    %c0_i32_1 = arith.constant 0 : i32
    return %c0_i32, %c0_i32_0 : i32, i32
  }
  func.func @transform_6(%arg0: i32) -> (i32, i32) {
    %c0_i32 = arith.constant 0 : i32
    %c0_i32_0 = arith.constant 0 : i32
    %c0_i32_1 = arith.constant 0 : i32
    return %c0_i32, %c0_i32_0 : i32, i32
  }
  func.func @transform_7(%arg0: i32) -> (i32, i32) {
    %c0_i32 = arith.constant 0 : i32
    %c0_i32_0 = arith.constant 0 : i32
    %c0_i32_1 = arith.constant 0 : i32
    return %c0_i32, %c0_i32_0 : i32, i32
  }
  func.func @transform_8(%arg0: i32) -> (i32, i32) {
    %c0_i32 = arith.constant 0 : i32
    %c0_i32_0 = arith.constant 0 : i32
    %c0_i32_1 = arith.constant 0 : i32
    return %c0_i32, %c0_i32_0 : i32, i32
  }
  func.func @transform_9(%arg0: i32) -> (i32, i32, i32) {
    %c0_i32 = arith.constant 0 : i32
    %c0_i32_0 = arith.constant 0 : i32
    %c0_i32_1 = arith.constant 0 : i32
    return %arg0, %c0_i32, %c0_i32_0 : i32, i32, i32
  }
}

</mosaic_0001>

<llo_original>
// kernel: tpu_custom_call.1
$region0: #{tpu_custom_call.1}
  #allocation0 [shape = 'u32[]', space=smem, size = 0x4, offset = 0x4, fixed_abs, tag = 'smem constant byte address 0x4 - core index']
  #allocation1 [shape = 'u32[144,128]{1,0:T(1,128)}', space=vmem, size = 0x12000, scoped, tag = 'internal scratch']
  %s0 = inlined_call_operand.vmem [shape: s32[2,16,1], index: 0, kind: input, shape index: {}]
  %s1 = inlined_call_operand.vmem [shape: s32[2,1,16], index: 1, kind: input, shape index: {}]
  %s2 = inlined_call_operand.vmem [shape: s32[2,16,1], index: 2, kind: input, shape index: {}]
  %s3 = inlined_call_operand.vmem [shape: f32[2,1,48], index: 3, kind: input, shape index: {}]
  %s4 = inlined_call_operand.vmem [shape: f32[256,32], index: 4, kind: input, shape index: {}]
  %s5 = inlined_call_operand.vmem [shape: f32[48,32], index: 5, kind: input, shape index: {}]
  %s6 = inlined_call_operand.vmem [shape: f32[1,32], index: 6, kind: input, shape index: {}]
  %s7 = inlined_call_operand.vmem [shape: f32[1,32], index: 7, kind: input, shape index: {}]
  %s8 = inlined_call_operand.vmem [shape: f32[1,32], index: 8, kind: input, shape index: {}]
  %s9 = inlined_call_operand.hbm [shape: f32[2,16,32], index: 9, kind: output, shape index: {}]
  %s10 = sld [smem:[#allocation0]]
  $region69: #{tpu_custom_call.1} parent=0
    _
  %s12 = ssub.s32 1, %s10
  %s13 = scalar_select 0, %s12, %s10
  $region1: #{tpu_custom_call.1} parent=0
    #allocation2 [shape = 'u8[16384]{0}', space=vmem, size = 0x4000, scoped, tag = 'output window, operand 0']
    #allocation3 [shape = 's32[2]{0}', space=sflag, size = 0x8, scoped, tag = 'scoped memory for tpu_custom_call.1']
    %14 = vsyncpa [#allocation3], 0
    %s15 = scalar_lea.sflag [#allocation3], 1
    %16 = vsyncpa %s15, 0
    loop: start=0, step=1, limit=4
    $region2: #{tpu_custom_call.1} parent=1 // loop_pre_header
      _
    $region3: #{tpu_custom_call.1} parent=1 // loop_header
      %s18 = sphi 0, %s22
      %p19 = scmp.ge.s32.totalorder %s18, 4
      %s28 = sphi 0, %s30
      %s31 = sphi 0, %s28
      %s32 = sphi 0, %s31
      %s48 = sphi 0, %s32
      %s54 = sphi 0, %s56
      %s57 = sphi 0, %s54
      %s58 = sphi 0, %s57
      %s74 = sphi 0, %s58
      %s80 = sphi 0, %s82
      %s83 = sphi 0, %s80
      %s84 = sphi 0, %s83
      %s100 = sphi 0, %s84
      %s106 = sphi 0, %s108
      %s109 = sphi 0, %s106
      %s110 = sphi 0, %s109
      %s126 = sphi 0, %s110
      %s130 = sphi 0, %s130
      %s132 = sphi 0, %s130
      %s133 = sphi 0, %s132
      %s147 = sphi 0, %s133
      %s151 = sphi 0, %s151
      %s153 = sphi 0, %s151
      %s154 = sphi 0, %s153
      %s168 = sphi 0, %s154
      %s172 = sphi 0, %s172
      %s174 = sphi 0, %s172
      %s175 = sphi 0, %s174
      %s189 = sphi 0, %s175
      %s193 = sphi 0, %s193
      %s195 = sphi 0, %s193
      %s196 = sphi 0, %s195
      %s210 = sphi 0, %s196
      %s214 = sphi 0, %s214
      %s216 = sphi 0, %s214
      %s217 = sphi 0, %s216
      %s231 = sphi 0, %s217
      %s237 = sphi 0, %s239
      %s240 = sphi 0, %s237
      %s241 = sphi 0, %s240
      %s257 = sphi 0, %s241
    $region4: #{tpu_custom_call.1} parent=1 // loop_header_branch
      %21 = sbr.rel (%p19) target = $region8
    $region5: #{tpu_custom_call.1} parent=1 // loop_body
      %s23 = ssub.s32 %s18, 1
      %s24 = ssub.s32 %s18, 2
      %s25 = sadd.s32 %s18, 1
      %s26 = ssub.s32 %s18, %s25
      %p27 = scmp.eq.s32.totalorder %s26, 0
      %s29 = sadd.s32 %s28, 1
      %s30 = scalar_select %p27, %s28, %s29
      %p33 = pneg %p27
      %p34 = scmp.eq.s32.totalorder %s18, 1
      %p35 = por %p33, %p34
      %p36 = scmp.ne.s32.totalorder %s28, %s31
      %p37 = scmp.eq.s32.totalorder %s18, 0
      %p38 = por %p36, %p37
      %p39 = scmp.ne.s32.totalorder %s28, %s31
      %p40 = scmp.eq.s32.totalorder %s23, 1
      %p41 = por %p39, %p40
      %p42 = scmp.ne.s32.totalorder %s31, %s32
      %p43 = scmp.eq.s32.totalorder %s23, 0
      %p44 = por %p42, %p43
      %p45 = scmp.ne.s32.totalorder %s31, %s32
      %p46 = scmp.eq.s32.totalorder %s24, 1
      %p47 = por %p45, %p46
      %p49 = scmp.ne.s32.totalorder %s32, %s48
      %p50 = scmp.eq.s32.totalorder %s24, 0
      %p51 = por %p49, %p50
      %s52 = ssub.s32 %s18, %s25
      %p53 = scmp.eq.s32.totalorder %s52, 0
      %s55 = sadd.s32 %s54, 1
      %s56 = scalar_select %p53, %s54, %s55
      %p59 = pneg %p53
      %p60 = scmp.eq.s32.totalorder %s18, 1
      %p61 = por %p59, %p60
      %p62 = scmp.ne.s32.totalorder %s54, %s57
      %p63 = scmp.eq.s32.totalorder %s18, 0
      %p64 = por %p62, %p63
      %p65 = scmp.ne.s32.totalorder %s54, %s57
      %p66 = scmp.eq.s32.totalorder %s23, 1
      %p67 = por %p65, %p66
      %p68 = scmp.ne.s32.totalorder %s57, %s58
      %p69 = scmp.eq.s32.totalorder %s23, 0
      %p70 = por %p68, %p69
      %p71 = scmp.ne.s32.totalorder %s57, %s58
      %p72 = scmp.eq.s32.totalorder %s24, 1
      %p73 = por %p71, %p72
      %p75 = scmp.ne.s32.totalorder %s58, %s74
      %p76 = scmp.eq.s32.totalorder %s24, 0
      %p77 = por %p75, %p76
      %s78 = ssub.s32 %s18, %s25
      %p79 = scmp.eq.s32.totalorder %s78, 0
      %s81 = sadd.s32 %s80, 1
      %s82 = scalar_select %p79, %s80, %s81
      %p85 = pneg %p79
      %p86 = scmp.eq.s32.totalorder %s18, 1
      %p87 = por %p85, %p86
      %p88 = scmp.ne.s32.totalorder %s80, %s83
      %p89 = scmp.eq.s32.totalorder %s18, 0
      %p90 = por %p88, %p89
      %p91 = scmp.ne.s32.totalorder %s80, %s83
      %p92 = scmp.eq.s32.totalorder %s23, 1
      %p93 = por %p91, %p92
      %p94 = scmp.ne.s32.totalorder %s83, %s84
      %p95 = scmp.eq.s32.totalorder %s23, 0
      %p96 = por %p94, %p95
      %p97 = scmp.ne.s32.totalorder %s83, %s84
      %p98 = scmp.eq.s32.totalorder %s24, 1
      %p99 = por %p97, %p98
      %p101 = scmp.ne.s32.totalorder %s84, %s100
      %p102 = scmp.eq.s32.totalorder %s24, 0
      %p103 = por %p101, %p102
      %s104 = ssub.s32 %s18, %s25
      %p105 = scmp.eq.s32.totalorder %s104, 0
      %s107 = sadd.s32 %s106, 1
      %s108 = scalar_select %p105, %s106, %s107
      %p111 = pneg %p105
      %p112 = scmp.eq.s32.totalorder %s18, 1
      %p113 = por %p111, %p112
      %p114 = scmp.ne.s32.totalorder %s106, %s109
      %p115 = scmp.eq.s32.totalorder %s18, 0
      %p116 = por %p114, %p115
      %p117 = scmp.ne.s32.totalorder %s106, %s109
      %p118 = scmp.eq.s32.totalorder %s23, 1
      %p119 = por %p117, %p118
      %p120 = scmp.ne.s32.totalorder %s109, %s110
      %p121 = scmp.eq.s32.totalorder %s23, 0
      %p122 = por %p120, %p121
      %p123 = scmp.ne.s32.totalorder %s109, %s110
      %p124 = scmp.eq.s32.totalorder %s24, 1
      %p125 = por %p123, %p124
      %p127 = scmp.ne.s32.totalorder %s110, %s126
      %p128 = scmp.eq.s32.totalorder %s24, 0
      %p129 = por %p127, %p128
      %s131 = sadd.s32 %s130, 1
      %p134 = scmp.eq.s32.totalorder %s18, 1
      %p135 = scmp.ne.s32.totalorder %s130, %s132
      %p136 = scmp.eq.s32.totalorder %s18, 0
      %p137 = por %p135, %p136
      %p138 = scmp.ne.s32.totalorder %s130, %s132
      %p139 = scmp.eq.s32.totalorder %s23, 1
      %p140 = por %p138, %p139
      %p141 = scmp.ne.s32.totalorder %s132, %s133
      %p142 = scmp.eq.s32.totalorder %s23, 0
      %p143 = por %p141, %p142
      %p144 = scmp.ne.s32.totalorder %s132, %s133
      %p145 = scmp.eq.s32.totalorder %s24, 1
      %p146 = por %p144, %p145
      %p148 = scmp.ne.s32.totalorder %s133, %s147
      %p149 = scmp.eq.s32.totalorder %s24, 0
      %p150 = por %p148, %p149
      %s152 = sadd.s32 %s151, 1
      %p155 = scmp.eq.s32.totalorder %s18, 1
      %p156 = scmp.ne.s32.totalorder %s151, %s153
      %p157 = scmp.eq.s32.totalorder %s18, 0
      %p158 = por %p156, %p157
      %p159 = scmp.ne.s32.totalorder %s151, %s153
      %p160 = scmp.eq.s32.totalorder %s23, 1
      %p161 = por %p159, %p160
      %p162 = scmp.ne.s32.totalorder %s153, %s154
      %p163 = scmp.eq.s32.totalorder %s23, 0
      %p164 = por %p162, %p163
      %p165 = scmp.ne.s32.totalorder %s153, %s154
      %p166 = scmp.eq.s32.totalorder %s24, 1
      %p167 = por %p165, %p166
      %p169 = scmp.ne.s32.totalorder %s154, %s168
      %p170 = scmp.eq.s32.totalorder %s24, 0
      %p171 = por %p169, %p170
      %s173 = sadd.s32 %s172, 1
      %p176 = scmp.eq.s32.totalorder %s18, 1
      %p177 = scmp.ne.s32.totalorder %s172, %s174
      %p178 = scmp.eq.s32.totalorder %s18, 0
      %p179 = por %p177, %p178
      %p180 = scmp.ne.s32.totalorder %s172, %s174
      %p181 = scmp.eq.s32.totalorder %s23, 1
      %p182 = por %p180, %p181
      %p183 = scmp.ne.s32.totalorder %s174, %s175
      %p184 = scmp.eq.s32.totalorder %s23, 0
      %p185 = por %p183, %p184
      %p186 = scmp.ne.s32.totalorder %s174, %s175
      %p187 = scmp.eq.s32.totalorder %s24, 1
      %p188 = por %p186, %p187
      %p190 = scmp.ne.s32.totalorder %s175, %s189
      %p191 = scmp.eq.s32.totalorder %s24, 0
      %p192 = por %p190, %p191
      %s194 = sadd.s32 %s193, 1
      %p197 = scmp.eq.s32.totalorder %s18, 1
      %p198 = scmp.ne.s32.totalorder %s193, %s195
      %p199 = scmp.eq.s32.totalorder %s18, 0
      %p200 = por %p198, %p199
      %p201 = scmp.ne.s32.totalorder %s193, %s195
      %p202 = scmp.eq.s32.totalorder %s23, 1
      %p203 = por %p201, %p202
      %p204 = scmp.ne.s32.totalorder %s195, %s196
      %p205 = scmp.eq.s32.totalorder %s23, 0
      %p206 = por %p204, %p205
      %p207 = scmp.ne.s32.totalorder %s195, %s196
      %p208 = scmp.eq.s32.totalorder %s24, 1
      %p209 = por %p207, %p208
      %p211 = scmp.ne.s32.totalorder %s196, %s210
      %p212 = scmp.eq.s32.totalorder %s24, 0
      %p213 = por %p211, %p212
      %s215 = sadd.s32 %s214, 1
      %p218 = scmp.eq.s32.totalorder %s18, 1
      %p219 = scmp.ne.s32.totalorder %s214, %s216
      %p220 = scmp.eq.s32.totalorder %s18, 0
      %p221 = por %p219, %p220
      %p222 = scmp.ne.s32.totalorder %s214, %s216
      %p223 = scmp.eq.s32.totalorder %s23, 1
      %p224 = por %p222, %p223
      %p225 = scmp.ne.s32.totalorder %s216, %s217
      %p226 = scmp.eq.s32.totalorder %s23, 0
      %p227 = por %p225, %p226
      %p228 = scmp.ne.s32.totalorder %s216, %s217
      %p229 = scmp.eq.s32.totalorder %s24, 1
      %p230 = por %p228, %p229
      %p232 = scmp.ne.s32.totalorder %s217, %s231
      %p233 = scmp.eq.s32.totalorder %s24, 0
      %p234 = por %p232, %p233
      %s235 = ssub.s32 %s18, %s25
      %p236 = scmp.eq.s32.totalorder %s235, 0
      %s238 = sadd.s32 %s237, 1
      %s239 = scalar_select %p236, %s237, %s238
      %p242 = pneg %p236
      %p243 = scmp.eq.s32.totalorder %s18, 1
      %p244 = por %p242, %p243
      %p245 = scmp.ne.s32.totalorder %s237, %s240
      %p246 = scmp.eq.s32.totalorder %s18, 0
      %p247 = por %p245, %p246
      %p248 = scmp.ne.s32.totalorder %s237, %s240
      %p249 = scmp.eq.s32.totalorder %s23, 1
      %p250 = por %p248, %p249
      %p251 = scmp.ne.s32.totalorder %s240, %s241
      %p252 = scmp.eq.s32.totalorder %s23, 0
      %p253 = por %p251, %p252
      %p254 = scmp.ne.s32.totalorder %s240, %s241
      %p255 = scmp.eq.s32.totalorder %s24, 1
      %p256 = por %p254, %p255
      %p258 = scmp.ne.s32.totalorder %s241, %s257
      %p259 = scmp.eq.s32.totalorder %s24, 0
      %p260 = por %p258, %p259
      %p261 = scmp.le.s32.totalorder 1, %s18
      %p262 = scmp.lt.s32.totalorder %s18, 3
      %p263 = pnand %p261, %p262
      %p264 = pneg %p263
      // Predicated region
      $region9: #{tpu_custom_call.1} parent=5 // pred_check
        _
      $region10: #{tpu_custom_call.1} parent=5 // pred_check_branch
        %266 = sbr.rel (%p263) target = $region12
      $region11: #{tpu_custom_call.1} parent=5 // pred_region
        %s267 = ssub.s32 %s18, 1
        // Predicated region
        $region13: #{tpu_custom_call.1} parent=11 // pred_check
          %p268 = pneg %p143
        $region14: #{tpu_custom_call.1} parent=11 // pred_check_branch
          %270 = sbr.rel (%p268) target = $region16
        $region15: #{tpu_custom_call.1} parent=11 // pred_region
          _
        $region16: #{tpu_custom_call.1} parent=11 // pred_fallthru
          _
        // Predicated region
        $region17: #{tpu_custom_call.1} parent=11 // pred_check
          %p271 = pneg %p164
        $region18: #{tpu_custom_call.1} parent=11 // pred_check_branch
          %273 = sbr.rel (%p271) target = $region20
        $region19: #{tpu_custom_call.1} parent=11 // pred_region
          _
        $region20: #{tpu_custom_call.1} parent=11 // pred_fallthru
          _
        // Predicated region
        $region21: #{tpu_custom_call.1} parent=11 // pred_check
          %p274 = pneg %p185
        $region22: #{tpu_custom_call.1} parent=11 // pred_check_branch
          %276 = sbr.rel (%p274) target = $region24
        $region23: #{tpu_custom_call.1} parent=11 // pred_region
          _
        $region24: #{tpu_custom_call.1} parent=11 // pred_fallthru
          _
        // Predicated region
        $region25: #{tpu_custom_call.1} parent=11 // pred_check
          %p277 = pneg %p206
        $region26: #{tpu_custom_call.1} parent=11 // pred_check_branch
          %279 = sbr.rel (%p277) target = $region28
        $region27: #{tpu_custom_call.1} parent=11 // pred_region
          _
        $region28: #{tpu_custom_call.1} parent=11 // pred_fallthru
          _
        // Predicated region
        $region29: #{tpu_custom_call.1} parent=11 // pred_check
          %p280 = pneg %p227
        $region30: #{tpu_custom_call.1} parent=11 // pred_check_branch
          %282 = sbr.rel (%p280) target = $region32
        $region31: #{tpu_custom_call.1} parent=11 // pred_region
          _
        $region32: #{tpu_custom_call.1} parent=11 // pred_fallthru
          _
      $region12: #{tpu_custom_call.1} parent=5 // pred_fallthru
        _
      %p283 = scmp.lt.s32.totalorder %s18, 2
      // Predicated region
      $region33: #{tpu_custom_call.1} parent=5 // pred_check
        %p284 = pneg %p283
      $region34: #{tpu_custom_call.1} parent=5 // pred_check_branch
        %286 = sbr.rel (%p284) target = $region36
      $region35: #{tpu_custom_call.1} parent=5 // pred_region
        // Predicated region
        $region37: #{tpu_custom_call.1} parent=35 // pred_check
          %p287 = pneg %p38
        $region38: #{tpu_custom_call.1} parent=35 // pred_check_branch
          %289 = sbr.rel (%p287) target = $region40
        $region39: #{tpu_custom_call.1} parent=35 // pred_region
          %p290 = scmp.lt.s32.totalorder %s18, 1
          %s291 = scalar_select %p290, %s18, 1
          %s292 = smul.addr %s291, 2
          %s293 = smul.addr %s292, 8
          %s294 = scalar_lea.vmem %s0, %s293
        $region40: #{tpu_custom_call.1} parent=35 // pred_fallthru
          _
        // Predicated region
        $region41: #{tpu_custom_call.1} parent=35 // pred_check
          %p295 = pneg %p64
        $region42: #{tpu_custom_call.1} parent=35 // pred_check_branch
          %297 = sbr.rel (%p295) target = $region44
        $region43: #{tpu_custom_call.1} parent=35 // pred_region
          %p298 = scmp.lt.s32.totalorder %s18, 1
          %s299 = scalar_select %p298, %s18, 1
          %s300 = scalar_lea.vmem %s1, %s299
        $region44: #{tpu_custom_call.1} parent=35 // pred_fallthru
          _
        // Predicated region
        $region45: #{tpu_custom_call.1} parent=35 // pred_check
          %p301 = pneg %p90
        $region46: #{tpu_custom_call.1} parent=35 // pred_check_branch
          %303 = sbr.rel (%p301) target = $region48
        $region47: #{tpu_custom_call.1} parent=35 // pred_region
          %p304 = scmp.lt.s32.totalorder %s18, 1
          %s305 = scalar_select %p304, %s18, 1
          %s306 = smul.addr %s305, 2
          %s307 = smul.addr %s306, 8
          %s308 = scalar_lea.vmem %s2, %s307
        $region48: #{tpu_custom_call.1} parent=35 // pred_fallthru
          _
        // Predicated region
        $region49: #{tpu_custom_call.1} parent=35 // pred_check
          %p309 = pneg %p116
        $region50: #{tpu_custom_call.1} parent=35 // pred_check_branch
          %311 = sbr.rel (%p309) target = $region52
        $region51: #{tpu_custom_call.1} parent=35 // pred_region
          %p312 = scmp.lt.s32.totalorder %s18, 1
          %s313 = scalar_select %p312, %s18, 1
          %s314 = scalar_lea.vmem %s3, %s313
        $region52: #{tpu_custom_call.1} parent=35 // pred_fallthru
          _
      $region36: #{tpu_custom_call.1} parent=5 // pred_fallthru
        _
      %p315 = scmp.le.s32.totalorder 1, %s18
      %p316 = scmp.lt.s32.totalorder %s18, 3
      %p317 = pnand %p315, %p316
      %p318 = pneg %p317
      // Predicated region
      $region53: #{tpu_custom_call.1} parent=5 // pred_check
        _
      $region54: #{tpu_custom_call.1} parent=5 // pred_check_branch
        %320 = sbr.rel (%p317) target = $region56
      $region55: #{tpu_custom_call.1} parent=5 // pred_region
        %s321 = ssub.s32 %s18, 1
        %p322 = scmp.lt.s32.totalorder %s23, 1
        %s323 = scalar_select %p322, %s23, 1
        %s324 = smul.addr %s323, 2
        %s325 = smul.addr %s324, 8
        %s326 = scalar_lea.vmem %s0, %s325
        %p327 = pneg %p44
        %p328 = pneg %p41
        %p329 = scmp.lt.s32.totalorder %s23, 1
        %s330 = scalar_select %p329, %s23, 1
        %s331 = scalar_lea.vmem %s1, %s330
        %p332 = pneg %p70
        %p333 = pneg %p67
        %p334 = scmp.lt.s32.totalorder %s23, 1
        %s335 = scalar_select %p334, %s23, 1
        %s336 = smul.addr %s335, 2
        %s337 = smul.addr %s336, 8
        %s338 = scalar_lea.vmem %s2, %s337
        %p339 = pneg %p96
        %p340 = pneg %p93
        %p341 = scmp.lt.s32.totalorder %s23, 1
        %s342 = scalar_select %p341, %s23, 1
        %s343 = scalar_lea.vmem %s3, %s342
        %p344 = pneg %p122
        %p345 = pneg %p119
        %p346 = pneg %p143
        %p347 = pneg %p140
        %p348 = pneg %p164
        %p349 = pneg %p161
        %p350 = pneg %p185
        %p351 = pneg %p182
        %p352 = pneg %p206
        %p353 = pneg %p203
        %p354 = pneg %p227
        %p355 = pneg %p224
        %p356 = pneg %p253
        %p357 = pneg %p250
        %s358 = sand.u32 %s240, 1
        %s359 = scalar_lea.sflag [#allocation3], %s358
        %s360 = sand.u32 %s240, 1
        %s361 = smul.addr %s360, 16
        %s362 = scalar_lea.vmem [#allocation2], %s361
        %p363 = scmp.lt.s32.totalorder %s23, 1
        %s364 = scalar_select %p363, %s23, 1
        %s365 = smul.addr %s364, 2
        %s366 = smul.addr %s365, 8
        %s367 = scalar_lea.vmem %s0, %s366
        %p368 = scmp.lt.s32.totalorder %s23, 1
        %s369 = scalar_select %p368, %s23, 1
        %s370 = scalar_lea.vmem %s1, %s369
        %p371 = scmp.lt.s32.totalorder %s23, 1
        %s372 = scalar_select %p371, %s23, 1
        %s373 = smul.addr %s372, 2
        %s374 = smul.addr %s373, 8
        %s375 = scalar_lea.vmem %s2, %s374
        %p376 = scmp.lt.s32.totalorder %s23, 1
        %s377 = scalar_select %p376, %s23, 1
        %s378 = scalar_lea.vmem %s3, %s377
        %v379 = vld [vmem:[%s370] sm:$0x1]
        %vm380 = vcmp.ne.s32.totalorder %v379, 1
        %v381 = vsel %vm380, 1, 0
        %v382 = vcvt.s32.f32 %v381
        %v383 = vlaneseq
        %v384 = vshrl.u32 %v383, 7
        %v385 = vadd.s32 %v384, 8
        %v386 = vlaneseq
        %v387 = vand.u32 %v386, 127
        %vm388 = vcmp.le.s32.totalorder %v387, %v384
        %vm389 = vcmp.le.s32.totalorder %v387, %v385
        %v391 = vlaneseq
        %v392 = vshrl.u32 %v391, 7
        %v393 = vsub.s32 0, %v392
        %v394 = vrot.slane %v382, %v393
        %v396 = vsel %vm388, %v394, 0.0
        %v397 = vsel %vm389, %v394, 0.0
        %vm398 = vcmask 130048
        %v399 = vsel %vm398, %v396, 0.0
        %400 = vadd.xlane.f32.xlu0 %v399
        %v401 = vpop.xlane.xlu0 %400
        %v402 = vsel %vm398, %v397, 0.0
        %403 = vadd.xlane.f32.xlu0 %v402
        %v404 = vpop.xlane.xlu0 %403
        %vm405 = vcmp.eq.s32.totalorder %v387, %v384
        %vm406 = vcmp.eq.s32.totalorder %v387, %v385
        %v407 = vsel %vm405, %v394, 0.0
        %v408 = vsel %vm406, %v394, 0.0
        %v409 = vsel %vm398, %v407, 0.0
        %410 = vadd.xlane.f32.xlu0 %v409
        %v411 = vpop.xlane.xlu0 %410
        %v412 = vsel %vm398, %v408, 0.0
        %413 = vadd.xlane.f32.xlu0 %v412
        %v414 = vpop.xlane.xlu0 %413
        %v415 = vadd.f32 %v401, 0.0
        %v416 = vadd.f32 %v404, 0.0
        %v417 = vmul.f32 %v415, %v411
        %v418 = vmul.f32 %v416, %v414
        %v419 = vcvt.f32.s32.to.zero.pseudo %v417
        %v420 = vcvt.f32.s32.to.zero.pseudo %v418
        %v421 = vadd.s32 %v419, 1
        %v422 = vadd.s32 %v420, 1
        %v423 = vadd.s32 %v387, 128
        %v424 = vld [vmem:[%s367] sm:$0xff]
        %v425 = vld [vmem:[%s367 + $0x8] sm:$0xff]
        %426 = vset.pattern.permute.xlu0 0
        %427 = vperm.xlu0 %426, %v424
        %v428 = vpop.permute.xlu0 %427
        %429 = vset.pattern.permute.xlu0 0
        %430 = vperm.xlu0 %429, %v425
        %v431 = vpop.permute.xlu0 %430
        %vm432 = vcmp.eq.s32.totalorder %v387, %v428
        %vm433 = vcmp.eq.s32.totalorder %v423, %v428
        %vm434 = vcmp.eq.s32.totalorder %v387, %v431
        %vm435 = vcmp.eq.s32.totalorder %v423, %v431
        %vm436 = vcmp.ne.s32.totalorder %v384, 1
        %vm437 = vcmp.ne.s32.totalorder %v385, 1
        %vm438 = vmand %vm432, %vm436
        %vm439 = vmand %vm433, %vm436
        %vm440 = vmand %vm434, %vm437
        %vm441 = vmand %vm435, %vm437
        %v442 = vadd.s32 %v421, 96
        %v443 = vadd.s32 %v422, 96
        %vm444 = vcmp.eq.s32.totalorder %v387, %v442
        %vm445 = vcmp.eq.s32.totalorder %v423, %v442
        %vm446 = vcmp.eq.s32.totalorder %v387, %v443
        %vm447 = vcmp.eq.s32.totalorder %v423, %v443
        %v448 = vld [vmem:[%s375] sm:$0xff]
        %v449 = vld [vmem:[%s375 + $0x8] sm:$0xff]
        %v450 = vadd.s32 %v448, 160
        %v451 = vadd.s32 %v449, 160
        %452 = vset.pattern.permute.xlu0 0
        %453 = vperm.xlu0 %452, %v450
        %v454 = vpop.permute.xlu0 %453
        %455 = vset.pattern.permute.xlu0 0
        %456 = vperm.xlu0 %455, %v451
        %v457 = vpop.permute.xlu0 %456
        %vm458 = vcmp.eq.s32.totalorder %v387, %v454
        %vm459 = vcmp.eq.s32.totalorder %v423, %v454
        %vm460 = vcmp.eq.s32.totalorder %v387, %v457
        %vm461 = vcmp.eq.s32.totalorder %v423, %v457
        %vm462 = vmor %vm438, %vm444
        %vm463 = vmor %vm439, %vm445
        %vm464 = vmor %vm440, %vm446
        %vm465 = vmor %vm441, %vm447
        %vm466 = vmor %vm462, %vm458
        %vm467 = vmor %vm463, %vm459
        %vm468 = vmor %vm464, %vm460
        %vm469 = vmor %vm465, %vm461
        %v470 = vsel %vm466, 1, 0
        %v471 = vsel %vm467, 1, 0
        %v472 = vsel %vm468, 1, 0
        %v473 = vsel %vm469, 1, 0
        %v474 = vcvt.s32.f32 %v470
        %v475 = vcvt.s32.f32 %v471
        %v476 = vcvt.s32.f32 %v472
        %v477 = vcvt.s32.f32 %v473
        %v478 = vld [vmem:[%s4] sm:$0xff]
        %v479 = vld [vmem:[%s4 + $0x8] sm:$0xff]
        %v480 = vld [vmem:[%s4 + $0x10] sm:$0xff]
        %v481 = vld [vmem:[%s4 + $0x18] sm:$0xff]
        %v482 = vld [vmem:[%s4 + $0x20] sm:$0xff]
        %v483 = vld [vmem:[%s4 + $0x28] sm:$0xff]
        %v484 = vld [vmem:[%s4 + $0x30] sm:$0xff]
        %v485 = vld [vmem:[%s4 + $0x38] sm:$0xff]
        %v486 = vld [vmem:[%s4 + $0x40] sm:$0xff]
        %v487 = vld [vmem:[%s4 + $0x48] sm:$0xff]
        %v488 = vld [vmem:[%s4 + $0x50] sm:$0xff]
        %v489 = vld [vmem:[%s4 + $0x58] sm:$0xff]
        %v490 = vld [vmem:[%s4 + $0x60] sm:$0xff]
        %v491 = vld [vmem:[%s4 + $0x68] sm:$0xff]
        %v492 = vld [vmem:[%s4 + $0x70] sm:$0xff]
        %v493 = vld [vmem:[%s4 + $0x78] sm:$0xff]
        %v494 = vld [vmem:[%s4 + $0x80] sm:$0xff]
        %v495 = vld [vmem:[%s4 + $0x88] sm:$0xff]
        %v496 = vld [vmem:[%s4 + $0x90] sm:$0xff]
        %v497 = vld [vmem:[%s4 + $0x98] sm:$0xff]
        %v498 = vld [vmem:[%s4 + $0xa0] sm:$0xff]
        %v499 = vld [vmem:[%s4 + $0xa8] sm:$0xff]
        %v500 = vld [vmem:[%s4 + $0xb0] sm:$0xff]
        %v501 = vld [vmem:[%s4 + $0xb8] sm:$0xff]
        %v502 = vld [vmem:[%s4 + $0xc0] sm:$0xff]
        %v503 = vld [vmem:[%s4 + $0xc8] sm:$0xff]
        %v504 = vld [vmem:[%s4 + $0xd0] sm:$0xff]
        %v505 = vld [vmem:[%s4 + $0xd8] sm:$0xff]
        %v506 = vld [vmem:[%s4 + $0xe0] sm:$0xff]
        %v507 = vld [vmem:[%s4 + $0xe8] sm:$0xff]
        %v508 = vld [vmem:[%s4 + $0xf0] sm:$0xff]
        %v509 = vld [vmem:[%s4 + $0xf8] sm:$0xff]
        %v510 = vld [vmem:[%s378] sm:$0x1]
        %v511 = vld [vmem:[%s5] sm:$0xff]
        %v512 = vld [vmem:[%s5 + $0x8] sm:$0xff]
        %v513 = vld [vmem:[%s5 + $0x10] sm:$0xff]
        %v514 = vld [vmem:[%s5 + $0x18] sm:$0xff]
        %v515 = vld [vmem:[%s5 + $0x20] sm:$0xff]
        %v516 = vld [vmem:[%s5 + $0x28] sm:$0xff]
        %v517 = vld [vmem:[%s6] sm:$0x1]
        %vm518 = vcmask 392192
        %v520 = vsel %vm518, %v510, 0
        %522 = vmatprep.subr.mxu0 0.0
        %523 = vmatpush1.msra.mxu0 %v511
        %524 = vmatprep.subr.mxu0 0.0
        %525 = vmatpush1.msra.mxu0 %v512
        %526 = vmatprep.subr.mxu0 0.0
        %527 = vmatpush1.msra.mxu0 %v513
        %528 = vmatprep.subr.mxu0 0.0
        %529 = vmatpush1.msra.mxu0 %v514
        %530 = vmatprep.subr.mxu0 0.0
        %531 = vmatpush1.msra.mxu0 %v515
        %532 = vmatprep.subr.mxu0 0.0
        %533 = vmatpush1.msra.mxu0 %v516
        %534 = vmatprep.subr.mxu0 0.0
        %535 = vmatpush1.msra.mxu0 0.0
        %536 = vmatprep.subr.mxu0 0.0
        %537 = vmatpush1.msra.mxu0 0.0
        %538 = vmatprep.subr.mxu0 0.0
        %539 = vmatpush1.msra.mxu0 0.0
        %540 = vmatprep.subr.mxu0 0.0
        %541 = vmatpush1.msra.mxu0 0.0
        %542 = vmatprep.subr.mxu0 0.0
        %543 = vmatpush1.msra.mxu0 0.0
        %544 = vmatprep.subr.mxu0 0.0
        %545 = vmatpush1.msra.mxu0 0.0
        %546 = vmatprep.subr.mxu0 0.0
        %547 = vmatpush1.msra.mxu0 0.0
        %548 = vmatprep.subr.mxu0 0.0
        %549 = vmatpush1.msra.mxu0 0.0
        %550 = vmatprep.subr.mxu0 0.0
        %551 = vmatpush1.msra.mxu0 0.0
        %552 = vmatprep.subr.mxu0 0.0
        %553 = vmatpush1.msra.mxu0 0.0
        %554 = vmatprep.subr.mxu0 0.0
        %555 = vmatpush1.msra.mxu0 0.0
        %556 = vmatprep.subr.mxu0 0.0
        %557 = vmatpush1.msra.mxu0 0.0
        %558 = vmatprep.subr.mxu0 0.0
        %559 = vmatpush1.msra.mxu0 0.0
        %560 = vmatprep.subr.mxu0 0.0
        %561 = vmatpush1.msra.mxu0 0.0
        %562 = vmatprep.subr.mxu0 0.0
        %563 = vmatpush1.msra.mxu0 0.0
        %564 = vmatprep.subr.mxu0 0.0
        %565 = vmatpush1.msra.mxu0 0.0
        %566 = vmatprep.subr.mxu0 0.0
        %567 = vmatpush1.msra.mxu0 0.0
        %568 = vmatprep.subr.mxu0 0.0
        %569 = vmatpush1.msra.mxu0 0.0
        %570 = vmatprep.subr.mxu0 0.0
        %571 = vmatpush1.msra.mxu0 0.0
        %572 = vmatprep.subr.mxu0 0.0
        %573 = vmatpush1.msra.mxu0 0.0
        %574 = vmatprep.subr.mxu0 0.0
        %575 = vmatpush1.msra.mxu0 0.0
        %576 = vmatprep.subr.mxu0 0.0
        %577 = vmatpush1.msra.mxu0 0.0
        %578 = vmatprep.subr.mxu0 0.0
        %579 = vmatpush1.msra.mxu0 0.0
        %580 = vmatprep.subr.mxu0 0.0
        %581 = vmatpush1.msra.mxu0 0.0
        %582 = vmatprep.subr.mxu0 0.0
        %583 = vmatpush1.msra.mxu0 0.0
        %584 = vmatprep.subr.mxu0 0.0
        %585 = vmatpush1.msra.mxu0 0.0
        %586 = vmatprep.mubr.f32.mxu0 0.0
        %587 = vmatmul.mubr.f32.gmra.mrb[0].mxu0 %v520
        %v588 = vpop.f32.mrb[0].mxu0
        %v589 = vadd.f32 %v517, %v588
        %v590 = vpop.f32.mrb[0].mxu0
        %591 = vdwg.mxu0
        %vm592 = vcmp.eq.s32.totalorder %v384, 1
        %vm593 = vcmp.eq.s32.totalorder %v385, 1
        %v594 = vsel %vm592, 1, 0
        %v595 = vsel %vm593, 1, 0
        %vm596 = vcmp.eq.s32.totalorder %v594, 1
        %vm597 = vcmp.eq.s32.totalorder %v595, 1
        %v598 = vlaneseq
        %v599 = vshrl.u32 %v598, 7
        %v600 = vsub.s32 0, %v599
        %v601 = vrot.slane %v589, %v600
        %v602 = vsel %vm596, %v601, 0.0
        %v603 = vsel %vm597, %v601, 0.0
        %604 = vmatprep.subr.mxu0 0.0
        %605 = vmatpush1.msra.mxu0 %v478
        %606 = vmatprep.subr.mxu0 0.0
        %607 = vmatpush1.msra.mxu0 %v479
        %608 = vmatprep.subr.mxu0 0.0
        %609 = vmatpush1.msra.mxu0 %v480
        %610 = vmatprep.subr.mxu0 0.0
        %611 = vmatpush1.msra.mxu0 %v481
        %612 = vmatprep.subr.mxu0 0.0
        %613 = vmatpush1.msra.mxu0 %v482
        %614 = vmatprep.subr.mxu0 0.0
        %615 = vmatpush1.msra.mxu0 %v483
        %616 = vmatprep.subr.mxu0 0.0
        %617 = vmatpush1.msra.mxu0 %v484
        %618 = vmatprep.subr.mxu0 0.0
        %619 = vmatpush1.msra.mxu0 %v485
        %620 = vmatprep.subr.mxu0 0.0
        %621 = vmatpush1.msra.mxu0 %v486
        %622 = vmatprep.subr.mxu0 0.0
        %623 = vmatpush1.msra.mxu0 %v487
        %624 = vmatprep.subr.mxu0 0.0
        %625 = vmatpush1.msra.mxu0 %v488
        %626 = vmatprep.subr.mxu0 0.0
        %627 = vmatpush1.msra.mxu0 %v489
        %628 = vmatprep.subr.mxu0 0.0
        %629 = vmatpush1.msra.mxu0 %v490
        %630 = vmatprep.subr.mxu0 0.0
        %631 = vmatpush1.msra.mxu0 %v491
        %632 = vmatprep.subr.mxu0 0.0
        %633 = vmatpush1.msra.mxu0 %v492
        %634 = vmatprep.subr.mxu0 0.0
        %635 = vmatpush1.msra.mxu0 %v493
        %636 = vmatprep.subr.mxu0 0.0
        %637 = vmatpush1.msra.mxu0 %v494
        %638 = vmatprep.subr.mxu0 0.0
        %639 = vmatpush1.msra.mxu0 %v495
        %640 = vmatprep.subr.mxu0 0.0
        %641 = vmatpush1.msra.mxu0 %v496
        %642 = vmatprep.subr.mxu0 0.0
        %643 = vmatpush1.msra.mxu0 %v497
        %644 = vmatprep.subr.mxu0 0.0
        %645 = vmatpush1.msra.mxu0 %v498
        %646 = vmatprep.subr.mxu0 0.0
        %647 = vmatpush1.msra.mxu0 %v499
        %648 = vmatprep.subr.mxu0 0.0
        %649 = vmatpush1.msra.mxu0 %v500
        %650 = vmatprep.subr.mxu0 0.0
        %651 = vmatpush1.msra.mxu0 %v501
        %652 = vmatprep.subr.mxu0 0.0
        %653 = vmatpush1.msra.mxu0 %v502
        %654 = vmatprep.subr.mxu0 0.0
        %655 = vmatpush1.msra.mxu0 %v503
        %656 = vmatprep.subr.mxu0 0.0
        %657 = vmatpush1.msra.mxu0 %v504
        %658 = vmatprep.subr.mxu0 0.0
        %659 = vmatpush1.msra.mxu0 %v505
        %660 = vmatprep.subr.mxu0 0.0
        %661 = vmatpush1.msra.mxu0 %v506
        %662 = vmatprep.subr.mxu0 0.0
        %663 = vmatpush1.msra.mxu0 %v507
        %664 = vmatprep.subr.mxu0 0.0
        %665 = vmatpush1.msra.mxu0 %v508
        %666 = vmatprep.subr.mxu0 0.0
        %667 = vmatpush1.msra.mxu0 %v509
        %668 = vmatprep.mubr.f32.mxu0 %v475
        %669 = vmatmul.mubr.f32.gmra.mrb[0].mxu0 %v474
        %v670 = vpop.f32.mrb[0].mxu0
        %v671 = vadd.f32 %v602, %v670
        %v672 = vpop.f32.mrb[0].mxu0
        %673 = vmatprep.mubr.f32.mxu0 %v477
        %674 = vmatmul.mubr.f32.gmra.mrb[0].mxu0 %v476
        %v675 = vpop.f32.mrb[0].mxu0
        %v676 = vadd.f32 %v603, %v675
        %v677 = vpop.f32.mrb[0].mxu0
        %678 = vdwg.mxu0
        %vm679 = vcmask 261120
        %v680 = vsel %vm679, %v671, 0.0
        %681 = vadd.xlane.f32.xlu0 %v680
        %v682 = vpop.xlane.xlu0 %681
        %v683 = vsel %vm679, %v676, 0.0
        %684 = vadd.xlane.f32.xlu0 %v683
        %v685 = vpop.xlane.xlu0 %684
        %v686 = vmul.f32 %v671, %v671
        %v687 = vmul.f32 %v676, %v676
        %v688 = vsel %vm679, %v686, 0.0
        %689 = vadd.xlane.f32.xlu0 %v688
        %v690 = vpop.xlane.xlu0 %689
        %v691 = vsel %vm679, %v687, 0.0
        %692 = vadd.xlane.f32.xlu0 %v691
        %v693 = vpop.xlane.xlu0 %692
        %v694 = vmul.f32 %v682, 0.03125
        %v695 = vmul.f32 %v685, 0.03125
        %v696 = vmul.f32 %v690, 0.03125
        %v697 = vmul.f32 %v693, 0.03125
        %v698 = vmul.f32 %v694, %v694
        %v699 = vmul.f32 %v695, %v695
        %v700 = vsub.f32 %v696, %v698
        %v701 = vsub.f32 %v697, %v699
        %v702 = vadd.f32 %v700, 1e-05
        %v703 = vadd.f32 %v701, 1e-05
        %v704 = vrsqrt.pop %v702
        %v705 = vrsqrt.pop %v703
        %v706 = vsub.f32 %v671, %v694
        %v707 = vsub.f32 %v676, %v695
        %v708 = vmul.f32 %v706, %v704
        %v709 = vmul.f32 %v707, %v705
        %v710 = vld [vmem:[%s7] sm:$0x1]
        %v712 = vlaneseq
        %v713 = vshrl.u32 %v712, 7
        %v714 = vsub.s32 0, %v713
        %v715 = vrot.slane %v710, %v714
        %v717 = vmul.f32 %v708, %v715
        %v718 = vmul.f32 %v709, %v715
        %v719 = vld [vmem:[%s8] sm:$0x1]
        %v721 = vlaneseq
        %v722 = vshrl.u32 %v721, 7
        %v723 = vsub.s32 0, %v722
        %v724 = vrot.slane %v719, %v723
        %v726 = vadd.f32 %v717, %v724
        %v727 = vadd.f32 %v718, %v724
        %728 = vst.msk [vmem:[%s362] sm:$0xff] %vm679, %v726
        %729 = vst.msk [vmem:[%s362 + $0x8] sm:$0xff] %vm679, %v727
        %s730 = sand.u32 %s240, 1
        %s731 = scalar_lea.sflag [#allocation3], %s730
        %s732 = sand.u32 %s240, 1
        %s733 = smul.addr %s732, 16
        %s734 = scalar_lea.vmem [#allocation2], %s733
        // Predicated region
        $region57: #{tpu_custom_call.1} parent=55 // pred_check
          %p735 = pneg %p250
        $region58: #{tpu_custom_call.1} parent=55 // pred_check_branch
          %737 = sbr.rel (%p735) target = $region60
        $region59: #{tpu_custom_call.1} parent=55 // pred_region
          %s739 = ssub.s32 256, 256
          %740 = vsyncadd %s731, %s739
          %s741 = smul.addr %s23, 2
          %s742 = smul.addr %s741, 128
          %s743 = scalar_lea.hbm %s9, %s742
          %s744 = sshll.u32 %s734, 4
          %s745 = int_to_ptr.vmem [resolvable:$true] %s744
          %750 = dma.vmem_to_hbm [thread:$0]  %s745, 256, %s743, %s731, 128, 128, 8
        $region60: #{tpu_custom_call.1} parent=55 // pred_fallthru
          _
      $region56: #{tpu_custom_call.1} parent=5 // pred_fallthru
        _
      %p751 = scmp.le.s32.totalorder 2, %s18
      // Predicated region
      $region61: #{tpu_custom_call.1} parent=5 // pred_check
        %p752 = pneg %p751
      $region62: #{tpu_custom_call.1} parent=5 // pred_check_branch
        %754 = sbr.rel (%p752) target = $region64
      $region63: #{tpu_custom_call.1} parent=5 // pred_region
        %s755 = ssub.s32 %s18, 2
        // Predicated region
        $region65: #{tpu_custom_call.1} parent=63 // pred_check
          %p756 = pneg %p256
        $region66: #{tpu_custom_call.1} parent=63 // pred_check_branch
          %758 = sbr.rel (%p756) target = $region68
        $region67: #{tpu_custom_call.1} parent=63 // pred_region
          %s759 = sand.u32 %s241, 1
          %s760 = scalar_lea.sflag [#allocation3], %s759
          %s761 = sand.u32 %s241, 1
          %s762 = smul.addr %s761, 16
          %s763 = scalar_lea.vmem [#allocation2], %s762
          %764 = dma.done %s760, 256
        $region68: #{tpu_custom_call.1} parent=63 // pred_fallthru
          _
      $region64: #{tpu_custom_call.1} parent=5 // pred_fallthru
        _
    $region6: #{tpu_custom_call.1} parent=1 // loop_footer
      %s22 = sadd.s32 1, %s18
    $region7: #{tpu_custom_call.1} parent=1 // loop_footer_branch
      %17 = sbr.rel target = $region3
    $region8: #{tpu_custom_call.1} parent=1 // loop_exit
      _
    %765 = vsyncpa [#allocation3], 1
    %s766 = scalar_lea.sflag [#allocation3], 1
    %767 = vsyncpa %s766, 1

</llo_original>
